<compile_context>
chip_gen: v7x
topology: tpu7x:2x2x1
jax: 0.10.0
libtpu: 0.0.40
codegen_flags: <defaults>
</compile_context>

<pallas_src>
import functools

import jax
import jax.numpy as jnp
from jax.experimental import pallas as pl
from jax.experimental.pallas import tpu as pltpu


# Below this many input bytes, a fused XLA slice is faster than any kernel
# launch (pallas_call fixed cost is several microseconds).
_SMALL_INPUT_BYTES = 1 << 20  # 1 MiB


def _split_dma_kernel(x_hbm, s0_hbm, s1_hbm, s2_hbm, sem, *, hw):
    """Pure data movement: three overlapping HBM->HBM DMAs, one per channel.

    x_hbm  : (N, 3*hw) ref in HBM (memory_space=pl.ANY); each row is
             [ch0 | ch1 | ch2] flattened, so a channel slab is a 2-D strided
             window (N rows x hw contiguous elements, row stride 3*hw).
    s*_hbm : (N, hw) output refs in HBM (memory_space=pl.ANY).
    sem    : DMA semaphore array of shape (3,).

    No VMEM staging, no grid, no lane-alignment requirement: the DMA engine
    handles the strided window directly, and the three copies proceed
    concurrently.
    """
    copies = []
    for c, dst in enumerate((s0_hbm, s1_hbm, s2_hbm)):
        cp = pltpu.make_async_copy(
            x_hbm.at[:, c * hw:(c + 1) * hw], dst, sem.at[c])
        cp.start()
        copies.append(cp)
    for cp in copies:  # all three DMAs are in flight; block until each lands
        cp.wait()


def _pallas_split(v1):
    """torch.split(v1, [1,1,1], dim=1) via direct HBM->HBM DMA."""
    N, C, H, W = v1.shape
    HW = H * W
    x2 = v1.reshape(N, C * HW)  # contiguous reshape: free, maximizes DMA runs

    out_shapes = tuple(
        jax.ShapeDtypeStruct((N, HW), v1.dtype) for _ in range(C))

    s0, s1, s2 = pl.pallas_call(
        functools.partial(_split_dma_kernel, hw=HW),
        out_shape=out_shapes,
        in_specs=[pl.BlockSpec(memory_space=pl.ANY)],
        out_specs=tuple(pl.BlockSpec(memory_space=pl.ANY) for _ in range(C)),
        scratch_shapes=[pltpu.SemaphoreType.DMA((C,))],
    )(x2)

    return tuple(s.reshape(N, 1, H, W) for s in (s0, s1, s2))


def model_forward(v1, *, force_pallas=False):
    """Returns (concatenated_tensor, (split0, split1, split2)).

    Matches torch.cat(torch.split(v1, [1,1,1], 1), 1) / torch.split semantics.
    """
    N, C, H, W = v1.shape
    assert C == 3, "split sizes [1, 1, 1] require exactly 3 channels on dim=1"

    # cat(split(v1, [1,1,1], 1), 1) == v1 exactly: return it with no copy.
    concatenated = v1

    nbytes = v1.size * jnp.dtype(v1.dtype).itemsize
    if nbytes < _SMALL_INPUT_BYTES and not force_pallas:
        # Tiny tensor: XLA slice fusion is sub-microsecond; skip the kernel.
        splits = tuple(v1[:, c:c + 1] for c in range(C))
    else:
        splits = _pallas_split(v1)

    return concatenated, splits


def init_unused_params(key):
    """Deterministic parameters matching Model.__init__ shapes (unused in forward)."""
    k1, k2 = jax.random.split(key, 2)
    params = {
        # Conv2d(3, 32, kernel_size=3, stride=3, padding=2)
        "conv_w": jax.random.normal(k1, (32, 3, 3, 3), jnp.float32) * 0.02,
        "conv_b": jnp.zeros((32,), jnp.float32),
        # Linear(30, 8)
        "lin_w": jax.random.normal(k2, (8, 30), jnp.float32) * 0.02,
        "lin_b": jnp.zeros((8,), jnp.float32),
    }
    # TODO(synk): torch.nn.QuantizePermute2d does not exist in PyTorch; the
    # self.split branch never executes in forward, so it is not modeled.
    return params


if __name__ == "__main__":
    key = jax.random.PRNGKey(0)
    k_in, k_p = jax.random.split(key)

    # Small shape consistent with split([1,1,1], dim=1): 3 channels.
    N, C, H, W = 2, 3, 16, 16
    v1 = jax.random.normal(k_in, (N, C, H, W), jnp.float32)

    _ = init_unused_params(k_p)  # parameters exist per __init__, unused in forward

    # Pure-JAX reference semantics.
    ref_splits = (v1[:, 0:1], v1[:, 1:2], v1[:, 2:3])
    ref_cat = jnp.concatenate(ref_splits, axis=1)

    # 1) Exercise the Pallas DMA kernel explicitly (tiny input, so force it).
    fwd_pallas = jax.jit(functools.partial(model_forward, force_pallas=True))
    cat, splits = fwd_pallas(v1)
    jax.block_until_ready((cat, splits))

    assert cat.shape == (N, C, H, W)
    assert jnp.array_equal(cat, ref_cat)
    for got, ref in zip(splits, ref_splits):
        assert got.shape == (N, 1, H, W)
        assert jnp.array_equal(got, ref)

    # 2) Default dispatch path (small input -> jnp slices) must agree too.
    cat2, splits2 = jax.jit(model_forward)(v1)
    jax.block_until_ready((cat2, splits2))
    assert jnp.array_equal(cat2, ref_cat)
    for got, ref in zip(splits2, ref_splits):
        assert jnp.array_equal(got, ref)

    print("KERNEL_OK")
</pallas_src>

<mosaic_0001>
module attributes {stable_mosaic.version = 11 : i64} {
  func.func @_split_dma_kernel(%arg0: memref<2x768xf32, #tpu.memory_space<any>>, %arg1: memref<2x256xf32, #tpu.memory_space<any>>, %arg2: memref<2x256xf32, #tpu.memory_space<any>>, %arg3: memref<2x256xf32, #tpu.memory_space<any>>, %arg4: memref<3x!tpu.dma_semaphore, #tpu.memory_space<semaphore_mem>>) attributes {dimension_semantics = [], scalar_prefetch = 0 : i64, scratch_operands = 1 : i64, tpu.core_type = #tpu.core_type<tc>} {
    %c0_i32 = arith.constant 0 : i32
    %c0_i32_0 = arith.constant 0 : i32
    %c0_i32_1 = arith.constant 0 : i32
    %0 = tpu.memref_slice %arg0[%c0_i32_0, %c0_i32_1] : memref<2x768xf32, #tpu.memory_space<any>> -> memref<2x256xf32, #tpu.memory_space<any>>
    %1 = tpu.memref_slice %arg4[%c0_i32] : memref<3x!tpu.dma_semaphore, #tpu.memory_space<semaphore_mem>> -> memref<1x!tpu.dma_semaphore, #tpu.memory_space<semaphore_mem>>
    %2 = tpu.memref_squeeze %1 : memref<1x!tpu.dma_semaphore, #tpu.memory_space<semaphore_mem>> -> memref<!tpu.dma_semaphore, #tpu.memory_space<semaphore_mem>>
    tpu.enqueue_dma source(%0 : memref<2x256xf32, #tpu.memory_space<any>>) target(%arg1 : memref<2x256xf32, #tpu.memory_space<any>>) target_semaphore(%2 : memref<!tpu.dma_semaphore, #tpu.memory_space<semaphore_mem>>)
    %c1_i32 = arith.constant 1 : i32
    %c0_i32_2 = arith.constant 0 : i32
    %c256_i32 = arith.constant 256 : i32
    %3 = tpu.memref_slice %arg0[%c0_i32_2, %c256_i32] : memref<2x768xf32, #tpu.memory_space<any>> -> memref<2x256xf32, #tpu.memory_space<any>>
    %4 = tpu.memref_slice %arg4[%c1_i32] : memref<3x!tpu.dma_semaphore, #tpu.memory_space<semaphore_mem>> -> memref<1x!tpu.dma_semaphore, #tpu.memory_space<semaphore_mem>>
    %5 = tpu.memref_squeeze %4 : memref<1x!tpu.dma_semaphore, #tpu.memory_space<semaphore_mem>> -> memref<!tpu.dma_semaphore, #tpu.memory_space<semaphore_mem>>
    tpu.enqueue_dma source(%3 : memref<2x256xf32, #tpu.memory_space<any>>) target(%arg2 : memref<2x256xf32, #tpu.memory_space<any>>) target_semaphore(%5 : memref<!tpu.dma_semaphore, #tpu.memory_space<semaphore_mem>>)
    %c2_i32 = arith.constant 2 : i32
    %c0_i32_3 = arith.constant 0 : i32
    %c512_i32 = arith.constant 512 : i32
    %6 = tpu.memref_slice %arg0[%c0_i32_3, %c512_i32] : memref<2x768xf32, #tpu.memory_space<any>> -> memref<2x256xf32, #tpu.memory_space<any>>
    %7 = tpu.memref_slice %arg4[%c2_i32] : memref<3x!tpu.dma_semaphore, #tpu.memory_space<semaphore_mem>> -> memref<1x!tpu.dma_semaphore, #tpu.memory_space<semaphore_mem>>
    %8 = tpu.memref_squeeze %7 : memref<1x!tpu.dma_semaphore, #tpu.memory_space<semaphore_mem>> -> memref<!tpu.dma_semaphore, #tpu.memory_space<semaphore_mem>>
    tpu.enqueue_dma source(%6 : memref<2x256xf32, #tpu.memory_space<any>>) target(%arg3 : memref<2x256xf32, #tpu.memory_space<any>>) target_semaphore(%8 : memref<!tpu.dma_semaphore, #tpu.memory_space<semaphore_mem>>)
    %c0_i32_4 = arith.constant 0 : i32
    %c0_i32_5 = arith.constant 0 : i32
    %c0_i32_6 = arith.constant 0 : i32
    %9 = tpu.memref_slice %arg0[%c0_i32_5, %c0_i32_6] : memref<2x768xf32, #tpu.memory_space<any>> -> memref<2x256xf32, #tpu.memory_space<any>>
    %10 = tpu.memref_slice %arg4[%c0_i32_4] : memref<3x!tpu.dma_semaphore, #tpu.memory_space<semaphore_mem>> -> memref<1x!tpu.dma_semaphore, #tpu.memory_space<semaphore_mem>>
    %11 = tpu.memref_squeeze %10 : memref<1x!tpu.dma_semaphore, #tpu.memory_space<semaphore_mem>> -> memref<!tpu.dma_semaphore, #tpu.memory_space<semaphore_mem>>
    tpu.wait_dma2 semaphore(%11 : memref<!tpu.dma_semaphore, #tpu.memory_space<semaphore_mem>>) src(%9 : memref<2x256xf32, #tpu.memory_space<any>>) dst(%arg1 : memref<2x256xf32, #tpu.memory_space<any>>)
    %c1_i32_7 = arith.constant 1 : i32
    %c0_i32_8 = arith.constant 0 : i32
    %c256_i32_9 = arith.constant 256 : i32
    %12 = tpu.memref_slice %arg0[%c0_i32_8, %c256_i32_9] : memref<2x768xf32, #tpu.memory_space<any>> -> memref<2x256xf32, #tpu.memory_space<any>>
    %13 = tpu.memref_slice %arg4[%c1_i32_7] : memref<3x!tpu.dma_semaphore, #tpu.memory_space<semaphore_mem>> -> memref<1x!tpu.dma_semaphore, #tpu.memory_space<semaphore_mem>>
    %14 = tpu.memref_squeeze %13 : memref<1x!tpu.dma_semaphore, #tpu.memory_space<semaphore_mem>> -> memref<!tpu.dma_semaphore, #tpu.memory_space<semaphore_mem>>
    tpu.wait_dma2 semaphore(%14 : memref<!tpu.dma_semaphore, #tpu.memory_space<semaphore_mem>>) src(%12 : memref<2x256xf32, #tpu.memory_space<any>>) dst(%arg2 : memref<2x256xf32, #tpu.memory_space<any>>)
    %c2_i32_10 = arith.constant 2 : i32
    %c0_i32_11 = arith.constant 0 : i32
    %c512_i32_12 = arith.constant 512 : i32
    %15 = tpu.memref_slice %arg0[%c0_i32_11, %c512_i32_12] : memref<2x768xf32, #tpu.memory_space<any>> -> memref<2x256xf32, #tpu.memory_space<any>>
    %16 = tpu.memref_slice %arg4[%c2_i32_10] : memref<3x!tpu.dma_semaphore, #tpu.memory_space<semaphore_mem>> -> memref<1x!tpu.dma_semaphore, #tpu.memory_space<semaphore_mem>>
    %17 = tpu.memref_squeeze %16 : memref<1x!tpu.dma_semaphore, #tpu.memory_space<semaphore_mem>> -> memref<!tpu.dma_semaphore, #tpu.memory_space<semaphore_mem>>
    tpu.wait_dma2 semaphore(%17 : memref<!tpu.dma_semaphore, #tpu.memory_space<semaphore_mem>>) src(%15 : memref<2x256xf32, #tpu.memory_space<any>>) dst(%arg3 : memref<2x256xf32, #tpu.memory_space<any>>)
    return
  }
}

</mosaic_0001>

<llo_original>
// kernel: model_forward.1
$region0: #{model_forward.1}
  #allocation0 [shape = 'u32[]', space=smem, size = 0x4, offset = 0x4, fixed_abs, tag = 'smem constant byte address 0x4 - core index']
  #allocation1 [shape = 'u32[144,128]{1,0:T(1,128)}', space=vmem, size = 0x12000, scoped, tag = 'internal scratch']
  #allocation2 [shape = 's32[3]{0}', space=sflag, size = 0xc, scoped, tag = 'scratch operand']
  #allocation3 [shape = 's32[]', space=sflag, size = 0x4, offset = 0, fixed_abs, tag = 'sflag constant byte address 0x0 - dummy sync flag']
  #allocation4 [shape = 's32[]', space=sflag, size = 0x4, offset = 0, fixed_abs, tag = 'sflag constant byte address 0x0 - dummy sync flag']
  #allocation5 [shape = 's32[]', space=sflag, size = 0x4, offset = 0, fixed_abs, tag = 'sflag constant byte address 0x0 - dummy sync flag']
  %s0 = inlined_call_operand.vmem [shape: f32[2,768], index: 0, kind: input, shape index: {}]
  %s1 = inlined_call_operand.vmem [shape: f32[2,256], index: 1, kind: output, shape index: {0}]
  %s2 = inlined_call_operand.vmem [shape: f32[2,256], index: 2, kind: output, shape index: {1}]
  %s3 = inlined_call_operand.vmem [shape: f32[2,256], index: 3, kind: output, shape index: {2}]
  %4 = xla_tuple %s1, %s2, %s3
  %s5 = sld [smem:[#allocation0]]
  $region92: #{model_forward.1} parent=0
    _
  %s7 = ssub.s32 1, %s5
  %s8 = scalar_select 0, %s7, %s5
  %p10 = scmp.lt.u32.totalorder 4, 8
  %p11 = pneg %p10
  // Predicated region
  $region2: #{model_forward.1} parent=0 // pred_check
    _
  $region3: #{model_forward.1} parent=0 // pred_check_branch
    %13 = sbr.rel (%p10) target = $region5
  $region4: #{model_forward.1} parent=0 // pred_region
    %s28 = sand.u32 4, 7
    %p29 = scmp.eq.s32.totalorder %s28, 0
    %p30 = pneg %p29
    // Predicated region
    $region17: #{model_forward.1} parent=4 // pred_check
      _
    $region18: #{model_forward.1} parent=4 // pred_check_branch
      %32 = sbr.rel (%p29) target = $region20
    $region19: #{model_forward.1} parent=4 // pred_region
      %s33 = sand.u32 4, 7
      %s34 = ssub.s32 4, %s33
      %s35 = scalar_lea.vmem %s0, %s34
      %s36 = ssub.s32 4, %s33
      %s37 = scalar_lea.vmem %s1, %s36
      %s38 = sshllo.u32 0, %s33
      loop: start=0, step=1, limit=1
      $region21: #{model_forward.1} parent=19 // loop_pre_header
        _
      $region22: #{model_forward.1} parent=19 // loop_header
        %s40 = sphi 0, %s44
        %p41 = scmp.ge.s32.totalorder %s40, 1
        %s45 = sphi %s35, %s35
        %s46 = sphi %s37, %s37
      $region23: #{model_forward.1} parent=19 // loop_header_branch
        %43 = sbr.rel (%p41) target = $region27
      $region24: #{model_forward.1} parent=19 // loop_body
        %v47 = vld [vmem:[%s45] sm:%s38]
        %48 = vst [vmem:[%s46] sm:%s38] %v47
      $region25: #{model_forward.1} parent=19 // loop_footer
        %s44 = sadd.s32 1, %s40
      $region26: #{model_forward.1} parent=19 // loop_footer_branch
        %39 = sbr.rel target = $region22
      $region27: #{model_forward.1} parent=19 // loop_exit
        _
    $region20: #{model_forward.1} parent=4 // pred_fallthru
      _
  $region5: #{model_forward.1} parent=0 // pred_fallthru
    _
  // Predicated region
  $region6: #{model_forward.1} parent=0 // pred_check
    %p14 = pneg %p10
  $region7: #{model_forward.1} parent=0 // pred_check_branch
    %16 = sbr.rel (%p14) target = $region9
  $region8: #{model_forward.1} parent=0 // pred_region
    %s17 = sshllo.u32 0, 4
    loop: start=0, step=1, limit=1
    $region10: #{model_forward.1} parent=8 // loop_pre_header
      _
    $region11: #{model_forward.1} parent=8 // loop_header
      %s19 = sphi 0, %s23
      %p20 = scmp.ge.s32.totalorder %s19, 1
      %s24 = sphi %s0, %s0
      %s25 = sphi %s1, %s1
    $region12: #{model_forward.1} parent=8 // loop_header_branch
      %22 = sbr.rel (%p20) target = $region16
    $region13: #{model_forward.1} parent=8 // loop_body
      %v26 = vld [vmem:[%s24] sm:%s17]
      %27 = vst [vmem:[%s25] sm:%s17] %v26
    $region14: #{model_forward.1} parent=8 // loop_footer
      %s23 = sadd.s32 1, %s19
    $region15: #{model_forward.1} parent=8 // loop_footer_branch
      %18 = sbr.rel target = $region11
    $region16: #{model_forward.1} parent=8 // loop_exit
      _
  $region9: #{model_forward.1} parent=0 // pred_fallthru
    _
  // Predicated region
  $region28: #{model_forward.1} parent=0 // pred_check
    _
  $region29: #{model_forward.1} parent=0 // pred_check_branch
    %51 = sbr.rel (0) target = $region31
  $region30: #{model_forward.1} parent=0 // pred_region
    %52 = vsyncadd [#allocation2], 64
  $region31: #{model_forward.1} parent=0 // pred_fallthru
    _
  %s53 = scalar_lea.vmem %s0, 4
  %s54 = scalar_lea.sflag [#allocation2], 1
  %p56 = scmp.lt.u32.totalorder 4, 8
  %p57 = pneg %p56
  // Predicated region
  $region32: #{model_forward.1} parent=0 // pred_check
    _
  $region33: #{model_forward.1} parent=0 // pred_check_branch
    %59 = sbr.rel (%p56) target = $region35
  $region34: #{model_forward.1} parent=0 // pred_region
    %s74 = sand.u32 4, 7
    %p75 = scmp.eq.s32.totalorder %s74, 0
    %p76 = pneg %p75
    // Predicated region
    $region47: #{model_forward.1} parent=34 // pred_check
      _
    $region48: #{model_forward.1} parent=34 // pred_check_branch
      %78 = sbr.rel (%p75) target = $region50
    $region49: #{model_forward.1} parent=34 // pred_region
      %s79 = sand.u32 4, 7
      %s80 = ssub.s32 4, %s79
      %s81 = scalar_lea.vmem %s53, %s80
      %s82 = ssub.s32 4, %s79
      %s83 = scalar_lea.vmem %s2, %s82
      %s84 = sshllo.u32 0, %s79
      loop: start=0, step=1, limit=1
      $region51: #{model_forward.1} parent=49 // loop_pre_header
        _
      $region52: #{model_forward.1} parent=49 // loop_header
        %s86 = sphi 0, %s90
        %p87 = scmp.ge.s32.totalorder %s86, 1
        %s91 = sphi %s81, %s81
        %s92 = sphi %s83, %s83
      $region53: #{model_forward.1} parent=49 // loop_header_branch
        %89 = sbr.rel (%p87) target = $region57
      $region54: #{model_forward.1} parent=49 // loop_body
        %v93 = vld [vmem:[%s91] sm:%s84]
        %94 = vst [vmem:[%s92] sm:%s84] %v93
      $region55: #{model_forward.1} parent=49 // loop_footer
        %s90 = sadd.s32 1, %s86
      $region56: #{model_forward.1} parent=49 // loop_footer_branch
        %85 = sbr.rel target = $region52
      $region57: #{model_forward.1} parent=49 // loop_exit
        _
    $region50: #{model_forward.1} parent=34 // pred_fallthru
      _
  $region35: #{model_forward.1} parent=0 // pred_fallthru
    _
  // Predicated region
  $region36: #{model_forward.1} parent=0 // pred_check
    %p60 = pneg %p56
  $region37: #{model_forward.1} parent=0 // pred_check_branch
    %62 = sbr.rel (%p60) target = $region39
  $region38: #{model_forward.1} parent=0 // pred_region
    %s63 = sshllo.u32 0, 4
    loop: start=0, step=1, limit=1
    $region40: #{model_forward.1} parent=38 // loop_pre_header
      _
    $region41: #{model_forward.1} parent=38 // loop_header
      %s65 = sphi 0, %s69
      %p66 = scmp.ge.s32.totalorder %s65, 1
      %s70 = sphi %s53, %s53
      %s71 = sphi %s2, %s2
    $region42: #{model_forward.1} parent=38 // loop_header_branch
      %68 = sbr.rel (%p66) target = $region46
    $region43: #{model_forward.1} parent=38 // loop_body
      %v72 = vld [vmem:[%s70] sm:%s63]
      %73 = vst [vmem:[%s71] sm:%s63] %v72
    $region44: #{model_forward.1} parent=38 // loop_footer
      %s69 = sadd.s32 1, %s65
    $region45: #{model_forward.1} parent=38 // loop_footer_branch
      %64 = sbr.rel target = $region41
    $region46: #{model_forward.1} parent=38 // loop_exit
      _
  $region39: #{model_forward.1} parent=0 // pred_fallthru
    _
  // Predicated region
  $region58: #{model_forward.1} parent=0 // pred_check
    _
  $region59: #{model_forward.1} parent=0 // pred_check_branch
    %97 = sbr.rel (0) target = $region61
  $region60: #{model_forward.1} parent=0 // pred_region
    %98 = vsyncadd %s54, 64
  $region61: #{model_forward.1} parent=0 // pred_fallthru
    _
  %s99 = scalar_lea.vmem %s0, 8
  %s100 = scalar_lea.sflag [#allocation2], 2
  %p102 = scmp.lt.u32.totalorder 4, 8
  %p103 = pneg %p102
  // Predicated region
  $region62: #{model_forward.1} parent=0 // pred_check
    _
  $region63: #{model_forward.1} parent=0 // pred_check_branch
    %105 = sbr.rel (%p102) target = $region65
  $region64: #{model_forward.1} parent=0 // pred_region
    %s120 = sand.u32 4, 7
    %p121 = scmp.eq.s32.totalorder %s120, 0
    %p122 = pneg %p121
    // Predicated region
    $region77: #{model_forward.1} parent=64 // pred_check
      _
    $region78: #{model_forward.1} parent=64 // pred_check_branch
      %124 = sbr.rel (%p121) target = $region80
    $region79: #{model_forward.1} parent=64 // pred_region
      %s125 = sand.u32 4, 7
      %s126 = ssub.s32 4, %s125
      %s127 = scalar_lea.vmem %s99, %s126
      %s128 = ssub.s32 4, %s125
      %s129 = scalar_lea.vmem %s3, %s128
      %s130 = sshllo.u32 0, %s125
      loop: start=0, step=1, limit=1
      $region81: #{model_forward.1} parent=79 // loop_pre_header
        _
      $region82: #{model_forward.1} parent=79 // loop_header
        %s132 = sphi 0, %s136
        %p133 = scmp.ge.s32.totalorder %s132, 1
        %s137 = sphi %s127, %s127
        %s138 = sphi %s129, %s129
      $region83: #{model_forward.1} parent=79 // loop_header_branch
        %135 = sbr.rel (%p133) target = $region87
      $region84: #{model_forward.1} parent=79 // loop_body
        %v139 = vld [vmem:[%s137] sm:%s130]
        %140 = vst [vmem:[%s138] sm:%s130] %v139
      $region85: #{model_forward.1} parent=79 // loop_footer
        %s136 = sadd.s32 1, %s132
      $region86: #{model_forward.1} parent=79 // loop_footer_branch
        %131 = sbr.rel target = $region82
      $region87: #{model_forward.1} parent=79 // loop_exit
        _
    $region80: #{model_forward.1} parent=64 // pred_fallthru
      _
  $region65: #{model_forward.1} parent=0 // pred_fallthru
    _
  // Predicated region
  $region66: #{model_forward.1} parent=0 // pred_check
    %p106 = pneg %p102
  $region67: #{model_forward.1} parent=0 // pred_check_branch
    %108 = sbr.rel (%p106) target = $region69
  $region68: #{model_forward.1} parent=0 // pred_region
    %s109 = sshllo.u32 0, 4
    loop: start=0, step=1, limit=1
    $region70: #{model_forward.1} parent=68 // loop_pre_header
      _
    $region71: #{model_forward.1} parent=68 // loop_header
      %s111 = sphi 0, %s115
      %p112 = scmp.ge.s32.totalorder %s111, 1
      %s116 = sphi %s99, %s99
      %s117 = sphi %s3, %s3
    $region72: #{model_forward.1} parent=68 // loop_header_branch
      %114 = sbr.rel (%p112) target = $region76
    $region73: #{model_forward.1} parent=68 // loop_body
      %v118 = vld [vmem:[%s116] sm:%s109]
      %119 = vst [vmem:[%s117] sm:%s109] %v118
    $region74: #{model_forward.1} parent=68 // loop_footer
      %s115 = sadd.s32 1, %s111
    $region75: #{model_forward.1} parent=68 // loop_footer_branch
      %110 = sbr.rel target = $region71
    $region76: #{model_forward.1} parent=68 // loop_exit
      _
  $region69: #{model_forward.1} parent=0 // pred_fallthru
    _
  // Predicated region
  $region88: #{model_forward.1} parent=0 // pred_check
    _
  $region89: #{model_forward.1} parent=0 // pred_check_branch
    %143 = sbr.rel (0) target = $region91
  $region90: #{model_forward.1} parent=0 // pred_region
    %144 = vsyncadd %s100, 64
  $region91: #{model_forward.1} parent=0 // pred_fallthru
    _
  %s145 = smul.u32 2, 1
  %s146 = smul.u32 %s145, 2
  %s147 = sshll.u32 %s146, 4
  %148 = dma.done [#allocation2], %s147
  %s149 = sshll.u32 %s146, 4
  %150 = dma.done %s54, %s149
  %s151 = sshll.u32 %s146, 4
  %152 = dma.done %s100, %s151
  %153 = vsyncmov [#allocation2]
  %s154 = vpop.sfrf %153
  %p155 = scmp.eq.s32.totalorder %s154, 0
  %p156 = pneg %p155
  %158 = shalt.err (%p156)
  %s159 = scalar_lea.sflag [#allocation2], 1
  %160 = vsyncmov %s159
  %s161 = vpop.sfrf %160
  %p162 = scmp.eq.s32.totalorder %s161, 0
  %p163 = pneg %p162
  %165 = shalt.err (%p163)
  %s166 = scalar_lea.sflag [#allocation2], 2
  %167 = vsyncmov %s166
  %s168 = vpop.sfrf %167
  %p169 = scmp.eq.s32.totalorder %s168, 0
  %p170 = pneg %p169
  %172 = shalt.err (%p170)

</llo_original>
